<compile_context>
chip_gen: v6e
topology: v6e:2x2x1
jax: 0.10.0
libtpu: 0.0.40
codegen_flags: <defaults>
</compile_context>

<pallas_src>
import functools

import jax
import jax.numpy as jnp
from jax.experimental import pallas as pl
from jax.experimental.pallas import tpu as pltpu


def _l2_normalize(x, eps=1e-6):
    # F.normalize(p=2, dim=1, eps): x / max(||x||_2, eps)
    return x / jnp.maximum(jnp.sqrt(jnp.sum(x * x, axis=-1, keepdims=True)), eps)


def _round_up(x, m):
    return (x + m - 1) // m * m


def _cdiv(a, b):
    return (a + b - 1) // b


def _vq_kernel(h_ref, cbn_ref, chard_ref, idx_ref):
    """One row-tile of vector quantization (eval branch, normalize=True)."""
    h_bf16 = h_ref[...]                                    # (TM, D) bf16 (cast in wrapper)
    cbn_f32 = cbn_ref[...]                                 # (K, D) f32, L2-normalized rows
    cbn_bf16 = cbn_f32.astype(jnp.bfloat16)                # tiny K*D cast, once per tile

    # similarities: (TM, D) x (K, D)^T contracted on D, fp32 accumulation on MXU.
    # Per-row scale of h is irrelevant for the argmax, so h is NOT normalized here.
    scores = jax.lax.dot_general(
        h_bf16, cbn_bf16,
        dimension_numbers=(((1,), (1,)), ((), ())),
        preferred_element_type=jnp.float32)                # (TM, K) f32

    k = scores.shape[-1]
    k_iota = jax.lax.broadcasted_iota(jnp.int32, scores.shape, 1)

    # argmax over K with first-index tie-break (== argmin of 2 - 2*sim).
    row_max = jnp.max(scores, axis=-1, keepdims=True)      # (TM, 1)
    idx_f = jnp.min(jnp.where(scores == row_max,
                              k_iota.astype(jnp.float32),
                              jnp.float32(k)),
                    axis=-1, keepdims=True)                 # (TM, 1) f32
    idx = idx_f.astype(jnp.int32)                           # (TM, 1) i32

    # Exact one-hot (0/1) gather of the fp32-normalized codebook rows on the MXU.
    onehot = (k_iota == idx).astype(jnp.float32)            # (TM, K)
    chard_ref[...] = jnp.dot(onehot, cbn_f32,
                             preferred_element_type=jnp.float32)

    # Indices writeback (tiny output; lane-sparse but off the critical path at
    # this tile size).  TODO(synk): transposed-score path for a lane-dense idx.
    idx_ref[...] = idx


@functools.partial(jax.jit, static_argnames=("target_rows",))
def trajectory_quantizer_forward(trajectories, codebook, target_rows=32768):
    """Eval-mode forward of TrajectoryQuantizer (VQQuantizer, normalize=True).

    trajectories: [B, L, D] float, codebook: [K, D] float.
    """
    B, L, D = trajectories.shape
    K, Dc = codebook.shape
    assert D == Dc
    N = B * L

    # --- hoisted out of the kernel: codebook normalization (once) ---
    cbn_f32 = _l2_normalize(codebook.astype(jnp.float32), eps=1e-6)   # (K, D) f32

    # --- row tiling ----------------------------------------------------------
    # Large tiles (default ~32K rows -> ~6 MB HBM/step, ~13 MiB VMEM double
    # buffered) so per-step overhead is negligible.  steps is chosen first so
    # padding never exceeds steps*ALIGN rows; keep >= 2 steps when there is
    # enough work so both v7x TensorCores are used.
    ALIGN = 32                                   # bf16 sublane-safe row multiple
    n_aligned = _round_up(max(N, ALIGN), ALIGN)
    steps = max(1, _cdiv(n_aligned, target_rows))
    if steps == 1 and n_aligned >= 4096:
        steps = 2
    tm = _round_up(_cdiv(n_aligned, steps), ALIGN)
    n_pad = steps * tm

    # --- input prep: bf16 cast fused with the (tiny) pad in one XLA pass ------
    h = trajectories.reshape(N, D)
    if n_pad != N:
        h = jnp.pad(h, ((0, n_pad - N), (0, 0)))  # <= steps*ALIGN extra rows
    h = h.astype(jnp.bfloat16)                     # no-op if already bf16 & unpadded

    cost = pl.CostEstimate(
        flops=4 * n_pad * K * D,                   # scores matmul + one-hot gather
        transcendentals=0,
        bytes_accessed=n_pad * (2 * D + 4 * D + 4) + K * D * 4)

    c_hard_flat, idx_flat = pl.pallas_call(
        _vq_kernel,
        out_shape=(
            jax.ShapeDtypeStruct((n_pad, D), jnp.float32),   # c_hard
            jax.ShapeDtypeStruct((n_pad, 1), jnp.int32),     # indices
        ),
        grid_spec=pltpu.PrefetchScalarGridSpec(
            num_scalar_prefetch=0,
            grid=(steps,),
            in_specs=[
                pl.BlockSpec((tm, D), lambda i: (i, 0)),     # h row tile (bf16)
                pl.BlockSpec((K, D), lambda i: (0, 0)),      # normalized codebook (f32)
            ],
            out_specs=[
                pl.BlockSpec((tm, D), lambda i: (i, 0)),
                pl.BlockSpec((tm, 1), lambda i: (i, 0)),
            ],
        ),
        compiler_params=pltpu.CompilerParams(
            dimension_semantics=("parallel",),
            vmem_limit_bytes=32 * 1024 * 1024),
        cost_estimate=cost,
    )(h, cbn_f32)

    idx = idx_flat[:N, 0]
    c_hard = c_hard_flat[:N].reshape(B, L, D)
    indices = idx.reshape(B, L)

    # Eval-mode q is exactly one_hot(indices, K); reconstructed here instead of
    # being written from the kernel (K=16 would force masked partial stores).
    q = jax.nn.one_hot(idx, K, dtype=jnp.bfloat16).reshape(B, L, K)

    # Eval mode: c_tilde == c_quantized == c_hard, loss is None.
    return {
        "quantized": c_hard,
        "indices": indices,
        "loss": None,
        "q": q,
        "c_tilde": c_hard,
        "c_hard": c_hard,
    }


def _reference(trajectories, codebook):
    """Pure-JAX reference of the eval forward, mirroring the kernel's numerics
    (bf16 matmul inputs as under torch.autocast; argmin(2-2*sim) == argmax(sim))."""
    B, L, D = trajectories.shape
    K = codebook.shape[0]
    h = trajectories.reshape(-1, D)
    cbn = _l2_normalize(codebook.astype(jnp.float32), eps=1e-6)
    scores = jnp.dot(h.astype(jnp.bfloat16), cbn.astype(jnp.bfloat16).T,
                     preferred_element_type=jnp.float32)
    idx = jnp.argmax(scores, axis=1).astype(jnp.int32)
    q = jax.nn.one_hot(idx, K, dtype=jnp.float32)
    c_hard = cbn[idx]
    return q, c_hard, idx


if __name__ == "__main__":
    # Module config (synthetic, deterministic init)
    num_codes, code_dim = 16, 32
    B, L = 2, 8

    key = jax.random.PRNGKey(0)
    k_cb, k_x = jax.random.split(key)

    # VQQuantizer.__init__ with normalize=True: randn codebook then L2-normalize rows
    codebook = jax.random.normal(k_cb, (num_codes, code_dim), dtype=jnp.float32)
    codebook = codebook / jnp.linalg.norm(codebook, axis=1, keepdims=True)

    trajectories = jax.random.normal(k_x, (B, L, code_dim), dtype=jnp.float32)

    out = trajectory_quantizer_forward(trajectories, codebook)
    jax.block_until_ready(out["quantized"])

    q_ref, c_hard_ref, idx_ref = _reference(trajectories, codebook)

    assert out["q"].shape == (B, L, num_codes) and out["q"].dtype == jnp.bfloat16
    assert out["quantized"].shape == (B, L, code_dim) and out["quantized"].dtype == jnp.float32
    assert out["indices"].shape == (B, L) and out["indices"].dtype == jnp.int32
    assert out["loss"] is None
    assert bool(jnp.all(out["indices"].reshape(-1) == idx_ref))
    assert bool(jnp.allclose(out["q"].astype(jnp.float32).reshape(-1, num_codes), q_ref))
    assert bool(jnp.allclose(out["quantized"].reshape(-1, code_dim), c_hard_ref, atol=1e-5))

    print("KERNEL_OK")
</pallas_src>

<mosaic_0001>
module attributes {stable_mosaic.version = 11 : i64} {
  func.func @_vq_kernel(%arg0: i32, %arg1: memref<32x32xbf16, #tpu.memory_space<vmem>>, %arg2: memref<16x32xf32, #tpu.memory_space<vmem>>, %arg3: memref<32x32xf32, #tpu.memory_space<vmem>>, %arg4: memref<32x1xi32, #tpu.memory_space<vmem>>) attributes {dimension_semantics = [#tpu.dimension_semantics<parallel>], iteration_bounds = array<i64: 1>, scalar_prefetch = 0 : i64, scratch_operands = 0 : i64, tpu.core_type = #tpu.core_type<tc>, window_params = [{transform_indices = @transform_0, window_bounds = array<i64: 32, 32>}, {pipeline_mode = #tpu.pipeline_mode<synchronous>, transform_indices = @transform_1, window_bounds = array<i64: 16, 32>}, {transform_indices = @transform_2, window_bounds = array<i64: 32, 32>}, {transform_indices = @transform_3, window_bounds = array<i64: 32, 1>}]} {
    %c0 = arith.constant 0 : index
    %c0_0 = arith.constant 0 : index
    %0 = vector.load %arg1[%c0, %c0_0] : memref<32x32xbf16, #tpu.memory_space<vmem>>, vector<32x32xbf16>
    %c0_1 = arith.constant 0 : index
    %c0_2 = arith.constant 0 : index
    %1 = vector.load %arg2[%c0_1, %c0_2] : memref<16x32xf32, #tpu.memory_space<vmem>>, vector<16x32xf32>
    %2 = arith.truncf %1 : vector<16x32xf32> to vector<16x32xbf16>
    %cst = arith.constant dense<0.000000e+00> : vector<32x16xf32>
    %3 = tpu.matmul %0, %2, %cst {dimension_numbers = #tpu.dot_dimension_numbers<[1], [1], [0], [0], [0, 0, 1, 0], [], []>} : vector<32x32xbf16>, vector<16x32xbf16>, vector<32x16xf32> -> vector<32x16xf32>
    %4 = tpu.iota {dimensions = array<i32: 1>} : vector<32x16xi32>
    %cst_3 = arith.constant dense<0xFF800000> : vector<32xf32>
    %5 = vector.multi_reduction <maximumf>, %3, %cst_3 [1] : vector<32x16xf32> to vector<32xf32>
    %6 = vector.shape_cast %5 : vector<32xf32> to vector<32x1xf32>
    %7 = vector.broadcast %6 : vector<32x1xf32> to vector<32x16xf32>
    %8 = arith.cmpf oeq, %3, %7 : vector<32x16xf32>
    %9 = arith.sitofp %4 : vector<32x16xi32> to vector<32x16xf32>
    %cst_4 = arith.constant 1.600000e+01 : f32
    %10 = vector.broadcast %cst_4 : f32 to vector<32x16xf32>
    %11 = arith.select %8, %9, %10 : vector<32x16xi1>, vector<32x16xf32>
    %cst_5 = arith.constant dense<0x7F800000> : vector<32xf32>
    %12 = vector.multi_reduction <minimumf>, %11, %cst_5 [1] : vector<32x16xf32> to vector<32xf32>
    %13 = vector.shape_cast %12 : vector<32xf32> to vector<32x1xf32>
    %14 = arith.fptosi %13 : vector<32x1xf32> to vector<32x1xi32>
    %15 = vector.broadcast %14 : vector<32x1xi32> to vector<32x16xi32>
    %16 = arith.cmpi eq, %4, %15 : vector<32x16xi32>
    %17 = arith.extui %16 : vector<32x16xi1> to vector<32x16xi32>
    %18 = arith.sitofp %17 : vector<32x16xi32> to vector<32x16xf32>
    %cst_6 = arith.constant dense<0.000000e+00> : vector<32x32xf32>
    %19 = tpu.matmul %18, %1, %cst_6 {dimension_numbers = #tpu.dot_dimension_numbers<[1], [0], [0], [1], [0, 0, 1, 1], [], []>} : vector<32x16xf32>, vector<16x32xf32>, vector<32x32xf32> -> vector<32x32xf32>
    %c0_7 = arith.constant 0 : index
    %c0_8 = arith.constant 0 : index
    %20 = vector.load %arg3[%c0_7, %c0_8] : memref<32x32xf32, #tpu.memory_space<vmem>>, vector<32x32xf32>
    tpu.vector_store %arg3[%c0_7, %c0_8], %19 {strides = array<i32>} : memref<32x32xf32, #tpu.memory_space<vmem>>, vector<32x32xf32>,
    %c0_9 = arith.constant 0 : index
    %c0_10 = arith.constant 0 : index
    %21 = vector.load %arg4[%c0_9, %c0_10] : memref<32x1xi32, #tpu.memory_space<vmem>>, vector<32x1xi32>
    tpu.vector_store %arg4[%c0_9, %c0_10], %14 {strides = array<i32>} : memref<32x1xi32, #tpu.memory_space<vmem>>, vector<32x1xi32>,
    return
  }
  func.func @transform_0(%arg0: i32) -> (i32, i32) {
    %c0_i32 = arith.constant 0 : i32
    %c0_i32_0 = arith.constant 0 : i32
    return %arg0, %c0_i32 : i32, i32
  }
  func.func @transform_1(%arg0: i32) -> (i32, i32) {
    %c0_i32 = arith.constant 0 : i32
    %c0_i32_0 = arith.constant 0 : i32
    %c0_i32_1 = arith.constant 0 : i32
    return %c0_i32, %c0_i32_0 : i32, i32
  }
  func.func @transform_2(%arg0: i32) -> (i32, i32) {
    %c0_i32 = arith.constant 0 : i32
    %c0_i32_0 = arith.constant 0 : i32
    return %arg0, %c0_i32 : i32, i32
  }
  func.func @transform_3(%arg0: i32) -> (i32, i32) {
    %c0_i32 = arith.constant 0 : i32
    %c0_i32_0 = arith.constant 0 : i32
    return %arg0, %c0_i32 : i32, i32
  }
}

</mosaic_0001>

<llo_original>
// kernel: squeeze.3
$region0: #{squeeze.3}
  %s0 = inlined_call_operand.vmem [shape: s32[16], index: 0, kind: input, shape index: {}]
  %s1 = inlined_call_operand.vmem [shape: s32[2,8], index: 1, kind: output, shape index: {}]
  $region1: #{squeeze.3} parent=0
    #allocation0 [shape = 'u8[4096]{0}', space=vmem, size = 0x1000, scoped, tag = 'scoped mem for output reshape']
    #allocation1 [shape = 'u8[4096]{0}', space=vmem, size = 0x1000, scoped, tag = 'scoped mem for input reshape']
    %s3 = sshll.u32 1, 1
    %s4 = ssub.s32 %s3, 1
    %v5 = vld [vmem:[%s0] sm:%s4]
    %6 = vst [vmem:[#allocation1] sm:%s4] %v5
    %v7 = vld [vmem:[#allocation1] sm:$0x1]
    %vm8 = vcmask 64512
    %9 = vst.msk [vmem:[#allocation0] sm:$0x1] %vm8, %v7
    %v10 = vld [vmem:[#allocation1] sm:$0x1]
    %11 = vrot.lane.b32.xlu0 %v10, 120
    %v12 = vpop.permute.xlu0 %11
    %vm13 = vcmask 64512
    %s14 = scalar_lea.vmem [#allocation0], 1
    %15 = vst.msk [vmem:[%s14] sm:$0x1] %vm13, %v12
    %s17 = sshll.u32 1, 2
    %s18 = ssub.s32 %s17, 1
    %v20 = vld [vmem:[#allocation0] sm:%s18]
    %s21 = sshll.u32 1, 2
    %s22 = ssub.s32 %s21, 1
    %23 = vst [vmem:[%s1] sm:%s22] %v20

// kernel: trajectory_quantizer_forward.1
$region0: #{trajectory_quantizer_forward.1}
  #allocation0 [shape = 'u32[]', space=smem, size = 0x4, offset = 0x4, fixed_abs, tag = 'smem constant byte address 0x4 - core index']
  #allocation1 [shape = 'u32[144,128]{1,0:T(1,128)}', space=vmem, size = 0x12000, scoped, tag = 'internal scratch']
  %s0 = inlined_call_operand.vmem [shape: bf16[32,32], index: 0, kind: input, shape index: {}]
  %s1 = inlined_call_operand.vmem [shape: f32[16,32], index: 1, kind: input, shape index: {}]
  %s2 = inlined_call_operand.vmem [shape: f32[32,32], index: 2, kind: output, shape index: {0}]
  %s3 = inlined_call_operand.vmem [shape: s32[32,1], index: 3, kind: output, shape index: {1}]
  %4 = xla_tuple %s2, %s3
  %s5 = sld [smem:[#allocation0]]
  $region26: #{trajectory_quantizer_forward.1} parent=0
    _
  %s7 = ssub.s32 1, %s5
  %s8 = scalar_select 0, %s7, %s5
  // Predicated region
  $region2: #{trajectory_quantizer_forward.1} parent=0 // pred_check
    _
  $region3: #{trajectory_quantizer_forward.1} parent=0 // pred_check_branch
    %10 = sbr.rel (0) target = $region5
  $region4: #{trajectory_quantizer_forward.1} parent=0 // pred_region
    _
  $region5: #{trajectory_quantizer_forward.1} parent=0 // pred_fallthru
    _
  // Predicated region
  $region6: #{trajectory_quantizer_forward.1} parent=0 // pred_check
    _
  $region7: #{trajectory_quantizer_forward.1} parent=0 // pred_check_branch
    %12 = sbr.rel (0) target = $region9
  $region8: #{trajectory_quantizer_forward.1} parent=0 // pred_region
    _
  $region9: #{trajectory_quantizer_forward.1} parent=0 // pred_fallthru
    _
  %v14 = vld [vmem:[%s0] sm:$0xf]
  %v15 = vld [vmem:[%s0 + $0x4] sm:$0xf]
  %v16 = vld [vmem:[%s0 + $0x8] sm:$0xf]
  %v17 = vld [vmem:[%s0 + $0xc] sm:$0xf]
  %v18 = vld [vmem:[%s1] sm:$0xff]
  %v19 = vld [vmem:[%s1 + $0x8] sm:$0xff]
  %v20 = vpack.c.bf16 %v19, %v18
  %v25 = vunpack.c.l.b16 %v14
  %v26 = vunpack.c.l.b16 %v15
  %v27 = vunpack.c.l.b16 %v16
  %v28 = vunpack.c.l.b16 %v17
  %v29 = vpack.c.b16 %v26, %v25
  %v30 = vpack.c.b16 %v28, %v27
  %vm31 = vcmask 261120
  %v33 = vsel %vm31, %v29, 0
  %v36 = vsel %vm31, %v30, 0
  %v39 = vsel %vm31, %v20, 0
  %41 = vmatprep.subr.bf16.mxu0 0
  %42 = vmatpush1.bf16.xpose.msra.mxu0 0
  %43 = vmatprep.subr.bf16.mxu0 0
  %44 = vmatpush1.bf16.xpose.msra.mxu0 0
  %45 = vmatprep.subr.bf16.mxu0 0
  %46 = vmatpush1.bf16.xpose.msra.mxu0 0
  %47 = vmatprep.subr.bf16.mxu0 0
  %48 = vmatpush1.bf16.xpose.msra.mxu0 0
  %49 = vmatprep.subr.bf16.mxu0 0
  %50 = vmatpush1.bf16.xpose.msra.mxu0 0
  %51 = vmatprep.subr.bf16.mxu0 0
  %52 = vmatpush1.bf16.xpose.msra.mxu0 0
  %53 = vmatprep.subr.bf16.mxu0 0
  %54 = vmatpush1.bf16.xpose.msra.mxu0 0
  %55 = vmatprep.subr.bf16.mxu0 0
  %56 = vmatpush1.bf16.xpose.msra.mxu0 %v39
  %57 = vmatprep.subr.bf16.mxu0 0
  %58 = vmatpush2.bf16.xpose.msra.mxu0 0
  %59 = vmatprep.subr.bf16.mxu0 0
  %60 = vmatpush2.bf16.xpose.msra.mxu0 0
  %61 = vmatprep.subr.bf16.mxu0 0
  %62 = vmatpush2.bf16.xpose.msra.mxu0 0
  %63 = vmatprep.subr.bf16.mxu0 0
  %64 = vmatpush2.bf16.xpose.msra.mxu0 0
  %65 = vmatprep.subr.bf16.mxu0 0
  %66 = vmatpush2.bf16.xpose.msra.mxu0 0
  %67 = vmatprep.subr.bf16.mxu0 0
  %68 = vmatpush2.bf16.xpose.msra.mxu0 0
  %69 = vmatprep.subr.bf16.mxu0 0
  %70 = vmatpush2.bf16.xpose.msra.mxu0 0
  %71 = vmatprep.subr.bf16.mxu0 0
  %72 = vmatpush2.bf16.xpose.msra.mxu0 0
  %73 = vmatprep.mubr.bf16.mxu0 0
  %74 = vmatmul.mubr.bf16.gmra.mxu0 %v33
  %v75 = vpop.f32.mrf.mxu0
  %v76 = vadd.f32 0.0, %v75
  %v77 = vpop.f32.mrf.mxu0
  %v78 = vpop.f32.mrf.mxu0
  %v79 = vadd.f32 0.0, %v78
  %v80 = vpop.f32.mrf.mxu0
  %81 = vmatprep.mubr.bf16.mxu0 0
  %82 = vmatmul.mubr.bf16.gmra.mxu0 %v36
  %v83 = vpop.f32.mrf.mxu0
  %v84 = vadd.f32 0.0, %v83
  %v85 = vpop.f32.mrf.mxu0
  %v86 = vpop.f32.mrf.mxu0
  %v87 = vadd.f32 0.0, %v86
  %v88 = vpop.f32.mrf.mxu0
  %89 = vdwg.mxu0
  %v90 = vlaneseq
  %v91 = vand.u32 %v90, 127
  %vm92 = vcmask 130048
  %v93 = vsel %vm92, %v76, -inf
  %94 = vmax.xlane.f32.xlu0 %v93
  %v95 = vpop.xlane.xlu0 %94
  %v96 = vsel %vm92, %v79, -inf
  %97 = vmax.xlane.f32.xlu0 %v96
  %v98 = vpop.xlane.xlu0 %97
  %v99 = vsel %vm92, %v84, -inf
  %100 = vmax.xlane.f32.xlu0 %v99
  %v101 = vpop.xlane.xlu0 %100
  %v102 = vsel %vm92, %v87, -inf
  %103 = vmax.xlane.f32.xlu0 %v102
  %v104 = vpop.xlane.xlu0 %103
  %vm105 = vcmp.eq.f32.partialorder %v76, %v95
  %vm106 = vcmp.eq.f32.partialorder %v79, %v98
  %vm107 = vcmp.eq.f32.partialorder %v84, %v101
  %vm108 = vcmp.eq.f32.partialorder %v87, %v104
  %v109 = vcvt.s32.f32 %v91
  %v110 = vsel %vm105, %v109, 16.0
  %v111 = vsel %vm106, %v109, 16.0
  %v112 = vsel %vm107, %v109, 16.0
  %v113 = vsel %vm108, %v109, 16.0
  %v114 = vsel %vm92, %v110, inf
  %115 = vmin.xlane.f32.xlu0 %v114
  %v116 = vpop.xlane.xlu0 %115
  %v117 = vsel %vm92, %v111, inf
  %118 = vmin.xlane.f32.xlu0 %v117
  %v119 = vpop.xlane.xlu0 %118
  %v120 = vsel %vm92, %v112, inf
  %121 = vmin.xlane.f32.xlu0 %v120
  %v122 = vpop.xlane.xlu0 %121
  %v123 = vsel %vm92, %v113, inf
  %124 = vmin.xlane.f32.xlu0 %v123
  %v125 = vpop.xlane.xlu0 %124
  %v126 = vcvt.f32.s32.to.zero.pseudo %v116
  %v127 = vcvt.f32.s32.to.zero.pseudo %v119
  %v128 = vcvt.f32.s32.to.zero.pseudo %v122
  %v129 = vcvt.f32.s32.to.zero.pseudo %v125
  %vm130 = vcmp.eq.s32.totalorder %v91, %v126
  %vm131 = vcmp.eq.s32.totalorder %v91, %v127
  %vm132 = vcmp.eq.s32.totalorder %v91, %v128
  %vm133 = vcmp.eq.s32.totalorder %v91, %v129
  %v134 = vsel %vm130, 1, 0
  %v135 = vsel %vm131, 1, 0
  %v136 = vsel %vm132, 1, 0
  %v137 = vsel %vm133, 1, 0
  %v138 = vcvt.s32.f32 %v134
  %v139 = vcvt.s32.f32 %v135
  %v140 = vcvt.s32.f32 %v136
  %v141 = vcvt.s32.f32 %v137
  %v143 = vsel %vm92, %v138, 0
  %v146 = vsel %vm92, %v139, 0
  %v149 = vsel %vm92, %v140, 0
  %v152 = vsel %vm92, %v141, 0
  %154 = vmatprep.subr.mxu0 0.0
  %155 = vmatpush1.msra.mxu0 0.0
  %156 = vmatprep.subr.mxu0 0.0
  %157 = vmatpush1.msra.mxu0 0.0
  %158 = vmatprep.subr.mxu0 0.0
  %159 = vmatpush1.msra.mxu0 0.0
  %160 = vmatprep.subr.mxu0 0.0
  %161 = vmatpush1.msra.mxu0 0.0
  %162 = vmatprep.subr.mxu0 0.0
  %163 = vmatpush1.msra.mxu0 0.0
  %164 = vmatprep.subr.mxu0 0.0
  %165 = vmatpush1.msra.mxu0 0.0
  %166 = vmatprep.subr.mxu0 0.0
  %167 = vmatpush1.msra.mxu0 0.0
  %168 = vmatprep.subr.mxu0 0.0
  %169 = vmatpush1.msra.mxu0 0.0
  %170 = vmatprep.subr.mxu0 0.0
  %171 = vmatpush1.msra.mxu0 0.0
  %172 = vmatprep.subr.mxu0 0.0
  %173 = vmatpush1.msra.mxu0 0.0
  %174 = vmatprep.subr.mxu0 0.0
  %175 = vmatpush1.msra.mxu0 0.0
  %176 = vmatprep.subr.mxu0 0.0
  %177 = vmatpush1.msra.mxu0 0.0
  %178 = vmatprep.subr.mxu0 0.0
  %179 = vmatpush1.msra.mxu0 0.0
  %180 = vmatprep.subr.mxu0 0.0
  %181 = vmatpush1.msra.mxu0 0.0
  %182 = vmatprep.subr.mxu0 0.0
  %183 = vmatpush1.msra.mxu0 %v19
  %184 = vmatprep.subr.mxu0 0.0
  %185 = vmatpush1.msra.mxu0 %v18
  %186 = vmatprep.subr.mxu0 0.0
  %187 = vmatpush2.msra.mxu0 0.0
  %188 = vmatprep.subr.mxu0 0.0
  %189 = vmatpush2.msra.mxu0 0.0
  %190 = vmatprep.subr.mxu0 0.0
  %191 = vmatpush2.msra.mxu0 0.0
  %192 = vmatprep.subr.mxu0 0.0
  %193 = vmatpush2.msra.mxu0 0.0
  %194 = vmatprep.subr.mxu0 0.0
  %195 = vmatpush2.msra.mxu0 0.0
  %196 = vmatprep.subr.mxu0 0.0
  %197 = vmatpush2.msra.mxu0 0.0
  %198 = vmatprep.subr.mxu0 0.0
  %199 = vmatpush2.msra.mxu0 0.0
  %200 = vmatprep.subr.mxu0 0.0
  %201 = vmatpush2.msra.mxu0 0.0
  %202 = vmatprep.subr.mxu0 0.0
  %203 = vmatpush2.msra.mxu0 0.0
  %204 = vmatprep.subr.mxu0 0.0
  %205 = vmatpush2.msra.mxu0 0.0
  %206 = vmatprep.subr.mxu0 0.0
  %207 = vmatpush2.msra.mxu0 0.0
  %208 = vmatprep.subr.mxu0 0.0
  %209 = vmatpush2.msra.mxu0 0.0
  %210 = vmatprep.subr.mxu0 0.0
  %211 = vmatpush2.msra.mxu0 0.0
  %212 = vmatprep.subr.mxu0 0.0
  %213 = vmatpush2.msra.mxu0 0.0
  %214 = vmatprep.subr.mxu0 0.0
  %215 = vmatpush2.msra.mxu0 0.0
  %216 = vmatprep.subr.mxu0 0.0
  %217 = vmatpush2.msra.mxu0 0.0
  %218 = vmatprep.mubr.f32.mxu0 0.0
  %219 = vmatmul.mubr.f32.gmra.mxu0 %v143
  %v220 = vpop.f32.mrf.mxu0
  %v221 = vadd.f32 0.0, %v220
  %v222 = vpop.f32.mrf.mxu0
  %223 = vmatprep.mubr.f32.mxu0 0.0
  %224 = vmatmul.mubr.f32.gmra.mxu0 %v146
  %v225 = vpop.f32.mrf.mxu0
  %v226 = vadd.f32 0.0, %v225
  %v227 = vpop.f32.mrf.mxu0
  %228 = vmatprep.mubr.f32.mxu0 0.0
  %229 = vmatmul.mubr.f32.gmra.mxu0 %v149
  %v230 = vpop.f32.mrf.mxu0
  %v231 = vadd.f32 0.0, %v230
  %v232 = vpop.f32.mrf.mxu0
  %233 = vmatprep.mubr.f32.mxu0 0.0
  %234 = vmatmul.mubr.f32.gmra.mxu0 %v152
  %v235 = vpop.f32.mrf.mxu0
  %v236 = vadd.f32 0.0, %v235
  %v237 = vpop.f32.mrf.mxu0
  %238 = vdwg.mxu0
  %239 = vst.msk [vmem:[%s2] sm:$0xff] %vm31, %v221
  %240 = vst.msk [vmem:[%s2 + $0x8] sm:$0xff] %vm31, %v226
  %241 = vst.msk [vmem:[%s2 + $0x10] sm:$0xff] %vm31, %v231
  %242 = vst.msk [vmem:[%s2 + $0x18] sm:$0xff] %vm31, %v236
  %vm243 = vcmask 7168
  %244 = vst.msk [vmem:[%s3] sm:$0xff] %vm243, %v126
  %245 = vst.msk [vmem:[%s3 + $0x8] sm:$0xff] %vm243, %v127
  %246 = vst.msk [vmem:[%s3 + $0x10] sm:$0xff] %vm243, %v128
  %247 = vst.msk [vmem:[%s3 + $0x18] sm:$0xff] %vm243, %v129
  // Predicated region
  $region10: #{trajectory_quantizer_forward.1} parent=0 // pred_check
    _
  $region11: #{trajectory_quantizer_forward.1} parent=0 // pred_check_branch
    %249 = sbr.rel (0) target = $region13
  $region12: #{trajectory_quantizer_forward.1} parent=0 // pred_region
    _
  $region13: #{trajectory_quantizer_forward.1} parent=0 // pred_fallthru
    _
  // Predicated region
  $region14: #{trajectory_quantizer_forward.1} parent=0 // pred_check
    _
  $region15: #{trajectory_quantizer_forward.1} parent=0 // pred_check_branch
    %251 = sbr.rel (0) target = $region17
  $region16: #{trajectory_quantizer_forward.1} parent=0 // pred_region
    _
  $region17: #{trajectory_quantizer_forward.1} parent=0 // pred_fallthru
    _
  // Predicated region
  $region18: #{trajectory_quantizer_forward.1} parent=0 // pred_check
    _
  $region19: #{trajectory_quantizer_forward.1} parent=0 // pred_check_branch
    %253 = sbr.rel (0) target = $region21
  $region20: #{trajectory_quantizer_forward.1} parent=0 // pred_region
    _
  $region21: #{trajectory_quantizer_forward.1} parent=0 // pred_fallthru
    _
  // Predicated region
  $region22: #{trajectory_quantizer_forward.1} parent=0 // pred_check
    _
  $region23: #{trajectory_quantizer_forward.1} parent=0 // pred_check_branch
    %255 = sbr.rel (0) target = $region25
  $region24: #{trajectory_quantizer_forward.1} parent=0 // pred_region
    _
  $region25: #{trajectory_quantizer_forward.1} parent=0 // pred_fallthru
    _

</llo_original>
